<compile_context>
chip_gen: v6e
topology: v6e:2x2x1
jax: 0.10.0
libtpu: 0.0.40
codegen_flags: <defaults>
</compile_context>

<pallas_src>
import math
import jax
import jax.numpy as jnp
from jax import lax
from jax.experimental import pallas as pl
from jax.experimental.pallas import tpu as pltpu

EPS = 1e-7        # HyperbolicUtils eps for float32
LN_EPS = 1e-5     # nn.LayerNorm default eps


def _round_up(x, m):
    return ((x + m - 1) // m) * m


def _make_hilt_kernel(din):
    inv_sqrt2 = 1.0 / math.sqrt(2.0)

    def kernel(slab_ref, w0t_ref, w0s_ref, b0_ref, gamma_ref, beta_ref,
               w1s_ref, b1s_ref, out_ref):
        # Feature-major tiles: features on sublanes, batch on lanes (lane-dense).
        t_p = slab_ref[0:din, :]                     # (Din, TB) parent tangent
        o_p = slab_ref[din:2 * din, :]               # (Din, TB) parent origin
        c = slab_ref[2 * din:2 * din + 1, :]         # (1, TB) parent curvature
        cc = slab_ref[2 * din + 1:2 * din + 2, :]    # (1, TB) child curvature

        # Feature-axis reductions on the (otherwise idle) MXU instead of the XLU.
        ones_d = jnp.ones((1, din), jnp.float32)
        x_nsq = jnp.dot(ones_d, o_p * o_p, preferred_element_type=jnp.float32)  # |x|^2
        xu = jnp.dot(ones_d, o_p * t_p, preferred_element_type=jnp.float32)     # <x,u>

        # ---- poincare_tangent_to_lorentz_tangent(t_p, o_p, c_parent) ----
        # All per-row quantities are lane-dense (1, TB) rows now.
        inv_sc = pl.reciprocal(jnp.sqrt(c) + EPS)
        one_m_cx = 1.0 - c * x_nsq
        den_inner = one_m_cx + EPS
        inv_den_sq = pl.reciprocal(den_inner * den_inner + EPS)
        u_l0 = (4.0 * c) * inv_sc * xu * inv_den_sq                              # (1, TB)
        u_lsp = ((2.0 * inv_sc) * inv_den_sq) * (one_m_cx * t_p
                                                 + (2.0 * c * xu) * o_p)         # (Din, TB)

        # ---- Linear(Din+1 -> H) ----
        # Lorentz time row handled as a rank-1 update (no sublane concat):
        # h = W0^T @ [u_l0; u_lsp] + b0
        h = (jnp.dot(w0s_ref[...], u_lsp, preferred_element_type=jnp.float32)
             + w0t_ref[...] * u_l0 + b0_ref[...])                                # (H, TB)

        # ---- two-pass LayerNorm over the feature (sublane) axis, sums on MXU ----
        hdim = h.shape[0]
        ones_h = jnp.ones((1, hdim), jnp.float32)
        mu = jnp.dot(ones_h, h, preferred_element_type=jnp.float32) * (1.0 / hdim)
        hc = h - mu
        var = jnp.dot(ones_h, hc * hc, preferred_element_type=jnp.float32) * (1.0 / hdim)
        h = hc * lax.rsqrt(var + LN_EPS) * gamma_ref[...] + beta_ref[...]

        # ---- exact (erf) GELU, matching PyTorch nn.GELU() ----
        h = 0.5 * h * (1.0 + lax.erf(h * inv_sqrt2))

        # ---- Linear(H -> Dout), spatial output columns only ----
        # (The time output column only feeds term2 below, which is exactly zero
        #  because the canonical child origin's spatial part is zero.)
        y_sp = (jnp.dot(w1s_ref[...], h, preferred_element_type=jnp.float32)
                + b1s_ref[...])                                                  # (Dout, TB)

        # ---- lorentz_tangent_to_poincare_tangent at canonical child origin ----
        # term1 factor folded: inv_sc_c/(x_L0+inv_sc_c+eps) == 1/(2+eps*(sqrt(cc)+eps))
        scale = pl.reciprocal(2.0 + EPS * (jnp.sqrt(cc) + EPS))                  # (1, TB)
        out_ref[...] = scale * y_sp

    return kernel


def hyperbolic_inter_level_transform(parent_tangent_p, parent_origin_p,
                                     parent_curvature, child_curvature,
                                     params, *, block_b=2048):
    """params = (W0 (Din+1,H), b0 (H,), gamma (H,), beta (H,), W1 (H,Dout+1), b1 (Dout+1,))."""
    W0, b0, gamma, beta, W1, b1 = params
    B, din = parent_tangent_p.shape
    hdim = W0.shape[1]
    dout = W1.shape[1] - 1
    f32 = jnp.float32

    # Feature-major (transposed) weight slabs; Lorentz time row/column split off.
    w0t = W0[0:1, :].T.astype(f32)                 # (H, 1)
    w0s = W0[1:, :].T.astype(f32)                  # (H, Din)
    b0c = jnp.reshape(b0, (hdim, 1)).astype(f32)   # (H, 1)
    gc = jnp.reshape(gamma, (hdim, 1)).astype(f32)
    bc = jnp.reshape(beta, (hdim, 1)).astype(f32)
    w1s = W1[:, 1:].T.astype(f32)                  # (Dout, H)
    b1c = jnp.reshape(b1[1:], (dout, 1)).astype(f32)

    # Fused, feature-major input slab: ONE DMA stream, batch on the lane axis.
    slab = jnp.concatenate(
        [parent_tangent_p.T.astype(f32),
         parent_origin_p.T.astype(f32),
         jnp.reshape(parent_curvature, (1, B)).astype(f32),
         jnp.reshape(child_curvature, (1, B)).astype(f32)],
        axis=0)                                    # (2*Din+2, B)

    # Lane-axis batch tile: multiple of 128; >=2 grid steps whenever B allows
    # (v7x dual TensorCore).  Tiles are tiny in this layout, so VMEM is never a
    # concern even on v7x's 64 MiB.
    cap_full = _round_up(B, 128)
    cap_half = max(128, _round_up((B + 1) // 2, 128))
    tb = max(128, _round_up(min(int(block_b), cap_full, cap_half), 128))
    b_pad = _round_up(B, tb)
    if b_pad != B:
        # Single pad of the already-fused slab (fuses with its construction);
        # zero columns are numerically safe and never read back.
        slab = jnp.pad(slab, ((0, 0), (0, b_pad - B)))

    rows = 2 * din + 2
    grid = (b_pad // tb,)

    def w_spec(a):
        # Full-shape block + constant index_map -> weights stay VMEM-resident.
        return pl.BlockSpec(a.shape, lambda i: (0, 0))

    out = pl.pallas_call(
        _make_hilt_kernel(din),
        out_shape=jax.ShapeDtypeStruct((dout, b_pad), f32),
        grid=grid,
        in_specs=[pl.BlockSpec((rows, tb), lambda i: (0, i)),
                  w_spec(w0t), w_spec(w0s), w_spec(b0c),
                  w_spec(gc), w_spec(bc), w_spec(w1s), w_spec(b1c)],
        out_specs=pl.BlockSpec((dout, tb), lambda i: (0, i)),
        compiler_params=pltpu.CompilerParams(
            dimension_semantics=("parallel",)),
    )(slab, w0t, w0s, b0c, gc, bc, w1s, b1c)

    return out[:, :B].T                            # back to batch-major (B, Dout)


def reference_forward(t_p, o_p, c, cc, W0, b0, gamma, beta, W1, b1):
    """Pure-JAX transcription of the PyTorch forward (curvatures as (B,1))."""
    eps = EPS
    c = c.reshape(-1, 1)
    cc = cc.reshape(-1, 1)
    sqrt_c = jnp.sqrt(c)
    x_nsq = jnp.sum(o_p * o_p, -1, keepdims=True)
    den_inner = 1.0 - c * x_nsq + eps
    den_sq = den_inner ** 2 + eps
    xu = jnp.sum(o_p * t_p, -1, keepdims=True)
    u_l0 = (1.0 / (sqrt_c + eps)) * 4.0 * c * xu / den_sq
    u_lsp = (2.0 / (sqrt_c + eps)) * ((1.0 - c * x_nsq) * t_p
                                      + 2.0 * c * o_p * xu) / den_sq
    u_l = jnp.concatenate([u_l0, u_lsp], -1)
    h = u_l @ W0 + b0
    mu = jnp.mean(h, -1, keepdims=True)
    var = jnp.mean((h - mu) ** 2, -1, keepdims=True)
    h = (h - mu) / jnp.sqrt(var + LN_EPS) * gamma + beta
    h = 0.5 * h * (1.0 + jax.scipy.special.erf(h / jnp.sqrt(2.0)))
    y = h @ W1 + b1
    inv_sc = 1.0 / (jnp.sqrt(cc) + eps)
    x0 = inv_sc
    x_sp = jnp.zeros((t_p.shape[0], W1.shape[1] - 1), jnp.float32)
    u0, usp = y[:, 0:1], y[:, 1:]
    den_f = x0 + inv_sc + eps
    return (inv_sc / den_f) * usp - (inv_sc / (den_f ** 2 + eps)) * x_sp * u0


if __name__ == "__main__":
    key = jax.random.PRNGKey(0)
    B, Din, Dout = 200, 16, 16
    mlp_in, mlp_out = Din + 1, Dout + 1                 # Lorentz dims
    H = max(mlp_out // 2, mlp_in // 2, mlp_in, 1)       # hidden width (== mlp_in)

    ks = jax.random.split(key, 6)
    # init_weights_general: xavier_uniform, gain = calculate_gain('relu') * 0.02
    gain = math.sqrt(2.0) * 0.02
    bound0 = gain * math.sqrt(6.0 / (mlp_in + H))
    W0 = jax.random.uniform(ks[0], (mlp_in, H), jnp.float32, -bound0, bound0)
    b0 = jnp.zeros((H,), jnp.float32)
    gamma = jnp.ones((H,), jnp.float32)                 # LayerNorm weight
    beta = jnp.zeros((H,), jnp.float32)                 # LayerNorm bias
    bound1 = gain * math.sqrt(6.0 / (H + mlp_out))
    W1 = jax.random.uniform(ks[1], (H, mlp_out), jnp.float32, -bound1, bound1)
    b1 = jnp.zeros((mlp_out,), jnp.float32)

    t_p = 0.1 * jax.random.normal(ks[2], (B, Din), jnp.float32)
    o_p = 0.1 * jax.random.normal(ks[3], (B, Din), jnp.float32)
    c_parent = jax.random.uniform(ks[4], (B, 1), jnp.float32, minval=0.5, maxval=1.5)
    c_child = jax.random.uniform(ks[5], (B, 1), jnp.float32, minval=0.5, maxval=1.5)

    # B=200 exercises the padded, multi-step (grid=(2,)) parallel path.
    out = hyperbolic_inter_level_transform(
        t_p, o_p, c_parent, c_child, (W0, b0, gamma, beta, W1, b1))
    out = jax.block_until_ready(out)

    ref = reference_forward(t_p, o_p, c_parent, c_child, W0, b0, gamma, beta, W1, b1)
    assert out.shape == (B, Dout)
    assert bool(jnp.allclose(out, ref, rtol=1e-4, atol=1e-5)), "mismatch vs JAX reference"
    print("KERNEL_OK")
</pallas_src>

<mosaic_0001>
module attributes {stable_mosaic.version = 11 : i64} {
  func.func @kernel(%arg0: i32, %arg1: memref<34x128xf32, #tpu.memory_space<vmem>>, %arg2: memref<17x1xf32, #tpu.memory_space<vmem>>, %arg3: memref<17x16xf32, #tpu.memory_space<vmem>>, %arg4: memref<17x1xf32, #tpu.memory_space<vmem>>, %arg5: memref<17x1xf32, #tpu.memory_space<vmem>>, %arg6: memref<17x1xf32, #tpu.memory_space<vmem>>, %arg7: memref<16x17xf32, #tpu.memory_space<vmem>>, %arg8: memref<16x1xf32, #tpu.memory_space<vmem>>, %arg9: memref<16x128xf32, #tpu.memory_space<vmem>>) attributes {dimension_semantics = [#tpu.dimension_semantics<parallel>], iteration_bounds = array<i64: 2>, scalar_prefetch = 0 : i64, scratch_operands = 0 : i64, tpu.core_type = #tpu.core_type<tc>, window_params = [{transform_indices = @transform_0, window_bounds = array<i64: 34, 128>}, {pipeline_mode = #tpu.pipeline_mode<synchronous>, transform_indices = @transform_1, window_bounds = array<i64: 17, 1>}, {pipeline_mode = #tpu.pipeline_mode<synchronous>, transform_indices = @transform_2, window_bounds = array<i64: 17, 16>}, {pipeline_mode = #tpu.pipeline_mode<synchronous>, transform_indices = @transform_3, window_bounds = array<i64: 17, 1>}, {pipeline_mode = #tpu.pipeline_mode<synchronous>, transform_indices = @transform_4, window_bounds = array<i64: 17, 1>}, {pipeline_mode = #tpu.pipeline_mode<synchronous>, transform_indices = @transform_5, window_bounds = array<i64: 17, 1>}, {pipeline_mode = #tpu.pipeline_mode<synchronous>, transform_indices = @transform_6, window_bounds = array<i64: 16, 17>}, {pipeline_mode = #tpu.pipeline_mode<synchronous>, transform_indices = @transform_7, window_bounds = array<i64: 16, 1>}, {transform_indices = @transform_8, window_bounds = array<i64: 16, 128>}]} {
    %c0 = arith.constant 0 : index
    %c0_0 = arith.constant 0 : index
    %0 = vector.load %arg1[%c0, %c0_0] : memref<34x128xf32, #tpu.memory_space<vmem>>, vector<16x128xf32>
    %c16 = arith.constant 16 : index
    %c0_1 = arith.constant 0 : index
    %1 = vector.load %arg1[%c16, %c0_1] : memref<34x128xf32, #tpu.memory_space<vmem>>, vector<16x128xf32>
    %c32 = arith.constant 32 : index
    %c0_2 = arith.constant 0 : index
    %2 = vector.load %arg1[%c32, %c0_2] : memref<34x128xf32, #tpu.memory_space<vmem>>, vector<1x128xf32>
    %c33 = arith.constant 33 : index
    %c0_3 = arith.constant 0 : index
    %3 = vector.load %arg1[%c33, %c0_3] : memref<34x128xf32, #tpu.memory_space<vmem>>, vector<1x128xf32>
    %cst = arith.constant 1.000000e+00 : f32
    %4 = vector.broadcast %cst : f32 to vector<1x16xf32>
    %5 = arith.mulf %1, %1 : vector<16x128xf32>
    %cst_4 = arith.constant dense<0.000000e+00> : vector<1x128xf32>
    %6 = tpu.matmul %4, %5, %cst_4 {dimension_numbers = #tpu.dot_dimension_numbers<[1], [0], [0], [1], [0, 0, 1, 1], [], []>} : vector<1x16xf32>, vector<16x128xf32>, vector<1x128xf32> -> vector<1x128xf32>
    %7 = arith.mulf %1, %0 : vector<16x128xf32>
    %cst_5 = arith.constant dense<0.000000e+00> : vector<1x128xf32>
    %8 = tpu.matmul %4, %7, %cst_5 {dimension_numbers = #tpu.dot_dimension_numbers<[1], [0], [0], [1], [0, 0, 1, 1], [], []>} : vector<1x16xf32>, vector<16x128xf32>, vector<1x128xf32> -> vector<1x128xf32>
    %9 = math.sqrt %2 : vector<1x128xf32>
    %cst_6 = arith.constant 1.000000e-07 : f32
    %10 = vector.broadcast %cst_6 : f32 to vector<1x128xf32>
    %11 = arith.addf %9, %10 : vector<1x128xf32>
    %12 = tpu.reciprocal %11 : vector<1x128xf32> -> vector<1x128xf32>
    %13 = arith.mulf %2, %6 : vector<1x128xf32>
    %cst_7 = arith.constant 1.000000e+00 : f32
    %14 = vector.broadcast %cst_7 : f32 to vector<1x128xf32>
    %15 = arith.subf %14, %13 : vector<1x128xf32>
    %cst_8 = arith.constant 1.000000e-07 : f32
    %16 = vector.broadcast %cst_8 : f32 to vector<1x128xf32>
    %17 = arith.addf %15, %16 : vector<1x128xf32>
    %18 = arith.mulf %17, %17 : vector<1x128xf32>
    %cst_9 = arith.constant 1.000000e-07 : f32
    %19 = vector.broadcast %cst_9 : f32 to vector<1x128xf32>
    %20 = arith.addf %18, %19 : vector<1x128xf32>
    %21 = tpu.reciprocal %20 : vector<1x128xf32> -> vector<1x128xf32>
    %cst_10 = arith.constant 4.000000e+00 : f32
    %22 = vector.broadcast %cst_10 : f32 to vector<1x128xf32>
    %23 = arith.mulf %22, %2 : vector<1x128xf32>
    %24 = arith.mulf %23, %12 : vector<1x128xf32>
    %25 = arith.mulf %24, %8 : vector<1x128xf32>
    %26 = arith.mulf %25, %21 : vector<1x128xf32>
    %cst_11 = arith.constant 2.000000e+00 : f32
    %27 = vector.broadcast %cst_11 : f32 to vector<1x128xf32>
    %28 = arith.mulf %27, %12 : vector<1x128xf32>
    %29 = arith.mulf %28, %21 : vector<1x128xf32>
    %30 = vector.broadcast %15 : vector<1x128xf32> to vector<16x128xf32>
    %31 = arith.mulf %30, %0 : vector<16x128xf32>
    %cst_12 = arith.constant 2.000000e+00 : f32
    %32 = vector.broadcast %cst_12 : f32 to vector<1x128xf32>
    %33 = arith.mulf %32, %2 : vector<1x128xf32>
    %34 = arith.mulf %33, %8 : vector<1x128xf32>
    %35 = vector.broadcast %34 : vector<1x128xf32> to vector<16x128xf32>
    %36 = arith.mulf %35, %1 : vector<16x128xf32>
    %37 = arith.addf %31, %36 : vector<16x128xf32>
    %38 = vector.broadcast %29 : vector<1x128xf32> to vector<16x128xf32>
    %39 = arith.mulf %38, %37 : vector<16x128xf32>
    %c0_13 = arith.constant 0 : index
    %c0_14 = arith.constant 0 : index
    %40 = vector.load %arg3[%c0_13, %c0_14] : memref<17x16xf32, #tpu.memory_space<vmem>>, vector<17x16xf32>
    %cst_15 = arith.constant dense<0.000000e+00> : vector<17x128xf32>
    %41 = tpu.matmul %40, %39, %cst_15 {dimension_numbers = #tpu.dot_dimension_numbers<[1], [0], [0], [1], [0, 0, 1, 1], [], []>} : vector<17x16xf32>, vector<16x128xf32>, vector<17x128xf32> -> vector<17x128xf32>
    %c0_16 = arith.constant 0 : index
    %c0_17 = arith.constant 0 : index
    %42 = vector.load %arg2[%c0_16, %c0_17] : memref<17x1xf32, #tpu.memory_space<vmem>>, vector<17x1xf32>
    %43 = vector.broadcast %42 : vector<17x1xf32> to vector<17x128xf32>
    %44 = vector.broadcast %26 : vector<1x128xf32> to vector<17x128xf32>
    %45 = arith.mulf %43, %44 : vector<17x128xf32>
    %46 = arith.addf %41, %45 : vector<17x128xf32>
    %c0_18 = arith.constant 0 : index
    %c0_19 = arith.constant 0 : index
    %47 = vector.load %arg4[%c0_18, %c0_19] : memref<17x1xf32, #tpu.memory_space<vmem>>, vector<17x1xf32>
    %48 = vector.broadcast %47 : vector<17x1xf32> to vector<17x128xf32>
    %49 = arith.addf %46, %48 : vector<17x128xf32>
    %cst_20 = arith.constant 1.000000e+00 : f32
    %50 = vector.broadcast %cst_20 : f32 to vector<1x17xf32>
    %cst_21 = arith.constant dense<0.000000e+00> : vector<1x128xf32>
    %51 = tpu.matmul %50, %49, %cst_21 {dimension_numbers = #tpu.dot_dimension_numbers<[1], [0], [0], [1], [0, 0, 1, 1], [], []>} : vector<1x17xf32>, vector<17x128xf32>, vector<1x128xf32> -> vector<1x128xf32>
    %cst_22 = arith.constant 0.0588235296 : f32
    %52 = vector.broadcast %cst_22 : f32 to vector<1x128xf32>
    %53 = arith.mulf %51, %52 : vector<1x128xf32>
    %54 = vector.broadcast %53 : vector<1x128xf32> to vector<17x128xf32>
    %55 = arith.subf %49, %54 : vector<17x128xf32>
    %56 = arith.mulf %55, %55 : vector<17x128xf32>
    %cst_23 = arith.constant dense<0.000000e+00> : vector<1x128xf32>
    %57 = tpu.matmul %50, %56, %cst_23 {dimension_numbers = #tpu.dot_dimension_numbers<[1], [0], [0], [1], [0, 0, 1, 1], [], []>} : vector<1x17xf32>, vector<17x128xf32>, vector<1x128xf32> -> vector<1x128xf32>
    %cst_24 = arith.constant 0.0588235296 : f32
    %58 = vector.broadcast %cst_24 : f32 to vector<1x128xf32>
    %59 = arith.mulf %57, %58 : vector<1x128xf32>
    %cst_25 = arith.constant 9.99999974E-6 : f32
    %60 = vector.broadcast %cst_25 : f32 to vector<1x128xf32>
    %61 = arith.addf %59, %60 : vector<1x128xf32>
    %62 = math.rsqrt %61 : vector<1x128xf32>
    %63 = vector.broadcast %62 : vector<1x128xf32> to vector<17x128xf32>
    %64 = arith.mulf %55, %63 : vector<17x128xf32>
    %c0_26 = arith.constant 0 : index
    %c0_27 = arith.constant 0 : index
    %65 = vector.load %arg5[%c0_26, %c0_27] : memref<17x1xf32, #tpu.memory_space<vmem>>, vector<17x1xf32>
    %66 = vector.broadcast %65 : vector<17x1xf32> to vector<17x128xf32>
    %67 = arith.mulf %64, %66 : vector<17x128xf32>
    %c0_28 = arith.constant 0 : index
    %c0_29 = arith.constant 0 : index
    %68 = vector.load %arg6[%c0_28, %c0_29] : memref<17x1xf32, #tpu.memory_space<vmem>>, vector<17x1xf32>
    %69 = vector.broadcast %68 : vector<17x1xf32> to vector<17x128xf32>
    %70 = arith.addf %67, %69 : vector<17x128xf32>
    %cst_30 = arith.constant 5.000000e-01 : f32
    %71 = vector.broadcast %cst_30 : f32 to vector<17x128xf32>
    %72 = arith.mulf %71, %70 : vector<17x128xf32>
    %cst_31 = arith.constant 0.707106769 : f32
    %73 = vector.broadcast %cst_31 : f32 to vector<17x128xf32>
    %74 = arith.mulf %70, %73 : vector<17x128xf32>
    %75 = math.erf %74 : vector<17x128xf32>
    %cst_32 = arith.constant 1.000000e+00 : f32
    %76 = vector.broadcast %cst_32 : f32 to vector<17x128xf32>
    %77 = arith.addf %76, %75 : vector<17x128xf32>
    %78 = arith.mulf %72, %77 : vector<17x128xf32>
    %c0_33 = arith.constant 0 : index
    %c0_34 = arith.constant 0 : index
    %79 = vector.load %arg7[%c0_33, %c0_34] : memref<16x17xf32, #tpu.memory_space<vmem>>, vector<16x17xf32>
    %cst_35 = arith.constant dense<0.000000e+00> : vector<16x128xf32>
    %80 = tpu.matmul %79, %78, %cst_35 {dimension_numbers = #tpu.dot_dimension_numbers<[1], [0], [0], [1], [0, 0, 1, 1], [], []>} : vector<16x17xf32>, vector<17x128xf32>, vector<16x128xf32> -> vector<16x128xf32>
    %c0_36 = arith.constant 0 : index
    %c0_37 = arith.constant 0 : index
    %81 = vector.load %arg8[%c0_36, %c0_37] : memref<16x1xf32, #tpu.memory_space<vmem>>, vector<16x1xf32>
    %82 = vector.broadcast %81 : vector<16x1xf32> to vector<16x128xf32>
    %83 = arith.addf %80, %82 : vector<16x128xf32>
    %84 = math.sqrt %3 : vector<1x128xf32>
    %cst_38 = arith.constant 1.000000e-07 : f32
    %85 = vector.broadcast %cst_38 : f32 to vector<1x128xf32>
    %86 = arith.addf %84, %85 : vector<1x128xf32>
    %cst_39 = arith.constant 1.000000e-07 : f32
    %87 = vector.broadcast %cst_39 : f32 to vector<1x128xf32>
    %88 = arith.mulf %87, %86 : vector<1x128xf32>
    %cst_40 = arith.constant 2.000000e+00 : f32
    %89 = vector.broadcast %cst_40 : f32 to vector<1x128xf32>
    %90 = arith.addf %89, %88 : vector<1x128xf32>
    %91 = tpu.reciprocal %90 : vector<1x128xf32> -> vector<1x128xf32>
    %92 = vector.broadcast %91 : vector<1x128xf32> to vector<16x128xf32>
    %93 = arith.mulf %92, %83 : vector<16x128xf32>
    %c0_41 = arith.constant 0 : index
    %c0_42 = arith.constant 0 : index
    %94 = vector.load %arg9[%c0_41, %c0_42] : memref<16x128xf32, #tpu.memory_space<vmem>>, vector<16x128xf32>
    tpu.vector_store %arg9[%c0_41, %c0_42], %93 {strides = array<i32>} : memref<16x128xf32, #tpu.memory_space<vmem>>, vector<16x128xf32>,
    return
  }
  func.func @transform_0(%arg0: i32) -> (i32, i32) {
    %c0_i32 = arith.constant 0 : i32
    %c0_i32_0 = arith.constant 0 : i32
    return %c0_i32, %arg0 : i32, i32
  }
  func.func @transform_1(%arg0: i32) -> (i32, i32) {
    %c0_i32 = arith.constant 0 : i32
    %c0_i32_0 = arith.constant 0 : i32
    %c0_i32_1 = arith.constant 0 : i32
    return %c0_i32, %c0_i32_0 : i32, i32
  }
  func.func @transform_2(%arg0: i32) -> (i32, i32) {
    %c0_i32 = arith.constant 0 : i32
    %c0_i32_0 = arith.constant 0 : i32
    %c0_i32_1 = arith.constant 0 : i32
    return %c0_i32, %c0_i32_0 : i32, i32
  }
  func.func @transform_3(%arg0: i32) -> (i32, i32) {
    %c0_i32 = arith.constant 0 : i32
    %c0_i32_0 = arith.constant 0 : i32
    %c0_i32_1 = arith.constant 0 : i32
    return %c0_i32, %c0_i32_0 : i32, i32
  }
  func.func @transform_4(%arg0: i32) -> (i32, i32) {
    %c0_i32 = arith.constant 0 : i32
    %c0_i32_0 = arith.constant 0 : i32
    %c0_i32_1 = arith.constant 0 : i32
    return %c0_i32, %c0_i32_0 : i32, i32
  }
  func.func @transform_5(%arg0: i32) -> (i32, i32) {
    %c0_i32 = arith.constant 0 : i32
    %c0_i32_0 = arith.constant 0 : i32
    %c0_i32_1 = arith.constant 0 : i32
    return %c0_i32, %c0_i32_0 : i32, i32
  }
  func.func @transform_6(%arg0: i32) -> (i32, i32) {
    %c0_i32 = arith.constant 0 : i32
    %c0_i32_0 = arith.constant 0 : i32
    %c0_i32_1 = arith.constant 0 : i32
    return %c0_i32, %c0_i32_0 : i32, i32
  }
  func.func @transform_7(%arg0: i32) -> (i32, i32) {
    %c0_i32 = arith.constant 0 : i32
    %c0_i32_0 = arith.constant 0 : i32
    %c0_i32_1 = arith.constant 0 : i32
    return %c0_i32, %c0_i32_0 : i32, i32
  }
  func.func @transform_8(%arg0: i32) -> (i32, i32) {
    %c0_i32 = arith.constant 0 : i32
    %c0_i32_0 = arith.constant 0 : i32
    return %c0_i32, %arg0 : i32, i32
  }
}

</mosaic_0001>

<llo_original>
// kernel: tpu_custom_call.1
$region0: #{tpu_custom_call.1}
  #allocation0 [shape = 'u32[]', space=smem, size = 0x4, offset = 0x4, fixed_abs, tag = 'smem constant byte address 0x4 - core index']
  #allocation1 [shape = 'u32[144,128]{1,0:T(1,128)}', space=vmem, size = 0x12000, scoped, tag = 'internal scratch']
  %s0 = inlined_call_operand.vmem [shape: f32[34,256], index: 0, kind: input, shape index: {}]
  %s1 = inlined_call_operand.vmem [shape: f32[17,1], index: 1, kind: input, shape index: {}]
  %s2 = inlined_call_operand.vmem [shape: f32[17,16], index: 2, kind: input, shape index: {}]
  %s3 = inlined_call_operand.vmem [shape: f32[17,1], index: 3, kind: input, shape index: {}]
  %s4 = inlined_call_operand.vmem [shape: f32[17,1], index: 4, kind: input, shape index: {}]
  %s5 = inlined_call_operand.vmem [shape: f32[17,1], index: 5, kind: input, shape index: {}]
  %s6 = inlined_call_operand.vmem [shape: f32[16,17], index: 6, kind: input, shape index: {}]
  %s7 = inlined_call_operand.vmem [shape: f32[16,1], index: 7, kind: input, shape index: {}]
  %s8 = inlined_call_operand.hbm [shape: f32[16,256], index: 8, kind: output, shape index: {}]
  %s9 = sld [smem:[#allocation0]]
  $region103: #{tpu_custom_call.1} parent=0
    _
  %s11 = ssub.s32 1, %s9
  %s12 = scalar_select 0, %s11, %s9
  $region1: #{tpu_custom_call.1} parent=0
    #allocation2 [shape = 'u8[40960]{0}', space=vmem, size = 0xa000, scoped, tag = 'input window, operand 0']
    #allocation3 [shape = 'u8[16384]{0}', space=vmem, size = 0x4000, scoped, tag = 'output window, operand 0']
    #allocation4 [shape = 's32[2]{0}', space=sflag, size = 0x8, scoped, tag = 'scoped memory for tpu_custom_call.1']
    %13 = vsyncpa [#allocation4], 0
    %s14 = scalar_lea.sflag [#allocation4], 1
    %15 = vsyncpa %s14, 0
    loop: start=0, step=1, limit=4
    $region2: #{tpu_custom_call.1} parent=1 // loop_pre_header
      _
    $region3: #{tpu_custom_call.1} parent=1 // loop_header
      %s17 = sphi 0, %s21
      %p18 = scmp.ge.s32.totalorder %s17, 4
      %s27 = sphi 0, %s29
      %s30 = sphi 0, %s27
      %s31 = sphi 0, %s30
      %s47 = sphi 0, %s31
      %s51 = sphi 0, %s51
      %s53 = sphi 0, %s51
      %s54 = sphi 0, %s53
      %s68 = sphi 0, %s54
      %s72 = sphi 0, %s72
      %s74 = sphi 0, %s72
      %s75 = sphi 0, %s74
      %s89 = sphi 0, %s75
      %s93 = sphi 0, %s93
      %s95 = sphi 0, %s93
      %s96 = sphi 0, %s95
      %s110 = sphi 0, %s96
      %s114 = sphi 0, %s114
      %s116 = sphi 0, %s114
      %s117 = sphi 0, %s116
      %s131 = sphi 0, %s117
      %s135 = sphi 0, %s135
      %s137 = sphi 0, %s135
      %s138 = sphi 0, %s137
      %s152 = sphi 0, %s138
      %s156 = sphi 0, %s156
      %s158 = sphi 0, %s156
      %s159 = sphi 0, %s158
      %s173 = sphi 0, %s159
      %s177 = sphi 0, %s177
      %s179 = sphi 0, %s177
      %s180 = sphi 0, %s179
      %s194 = sphi 0, %s180
      %s200 = sphi 0, %s202
      %s203 = sphi 0, %s200
      %s204 = sphi 0, %s203
      %s220 = sphi 0, %s204
    $region4: #{tpu_custom_call.1} parent=1 // loop_header_branch
      %20 = sbr.rel (%p18) target = $region8
    $region5: #{tpu_custom_call.1} parent=1 // loop_body
      %s22 = ssub.s32 %s17, 1
      %s23 = ssub.s32 %s17, 2
      %s24 = sadd.s32 %s17, 1
      %s25 = ssub.s32 %s17, %s24
      %p26 = scmp.eq.s32.totalorder %s25, 0
      %s28 = sadd.s32 %s27, 1
      %s29 = scalar_select %p26, %s27, %s28
      %p32 = pneg %p26
      %p33 = scmp.eq.s32.totalorder %s17, 1
      %p34 = por %p32, %p33
      %p35 = scmp.ne.s32.totalorder %s27, %s30
      %p36 = scmp.eq.s32.totalorder %s17, 0
      %p37 = por %p35, %p36
      %p38 = scmp.ne.s32.totalorder %s27, %s30
      %p39 = scmp.eq.s32.totalorder %s22, 1
      %p40 = por %p38, %p39
      %p41 = scmp.ne.s32.totalorder %s30, %s31
      %p42 = scmp.eq.s32.totalorder %s22, 0
      %p43 = por %p41, %p42
      %p44 = scmp.ne.s32.totalorder %s30, %s31
      %p45 = scmp.eq.s32.totalorder %s23, 1
      %p46 = por %p44, %p45
      %p48 = scmp.ne.s32.totalorder %s31, %s47
      %p49 = scmp.eq.s32.totalorder %s23, 0
      %p50 = por %p48, %p49
      %s52 = sadd.s32 %s51, 1
      %p55 = scmp.eq.s32.totalorder %s17, 1
      %p56 = scmp.ne.s32.totalorder %s51, %s53
      %p57 = scmp.eq.s32.totalorder %s17, 0
      %p58 = por %p56, %p57
      %p59 = scmp.ne.s32.totalorder %s51, %s53
      %p60 = scmp.eq.s32.totalorder %s22, 1
      %p61 = por %p59, %p60
      %p62 = scmp.ne.s32.totalorder %s53, %s54
      %p63 = scmp.eq.s32.totalorder %s22, 0
      %p64 = por %p62, %p63
      %p65 = scmp.ne.s32.totalorder %s53, %s54
      %p66 = scmp.eq.s32.totalorder %s23, 1
      %p67 = por %p65, %p66
      %p69 = scmp.ne.s32.totalorder %s54, %s68
      %p70 = scmp.eq.s32.totalorder %s23, 0
      %p71 = por %p69, %p70
      %s73 = sadd.s32 %s72, 1
      %p76 = scmp.eq.s32.totalorder %s17, 1
      %p77 = scmp.ne.s32.totalorder %s72, %s74
      %p78 = scmp.eq.s32.totalorder %s17, 0
      %p79 = por %p77, %p78
      %p80 = scmp.ne.s32.totalorder %s72, %s74
      %p81 = scmp.eq.s32.totalorder %s22, 1
      %p82 = por %p80, %p81
      %p83 = scmp.ne.s32.totalorder %s74, %s75
      %p84 = scmp.eq.s32.totalorder %s22, 0
      %p85 = por %p83, %p84
      %p86 = scmp.ne.s32.totalorder %s74, %s75
      %p87 = scmp.eq.s32.totalorder %s23, 1
      %p88 = por %p86, %p87
      %p90 = scmp.ne.s32.totalorder %s75, %s89
      %p91 = scmp.eq.s32.totalorder %s23, 0
      %p92 = por %p90, %p91
      %s94 = sadd.s32 %s93, 1
      %p97 = scmp.eq.s32.totalorder %s17, 1
      %p98 = scmp.ne.s32.totalorder %s93, %s95
      %p99 = scmp.eq.s32.totalorder %s17, 0
      %p100 = por %p98, %p99
      %p101 = scmp.ne.s32.totalorder %s93, %s95
      %p102 = scmp.eq.s32.totalorder %s22, 1
      %p103 = por %p101, %p102
      %p104 = scmp.ne.s32.totalorder %s95, %s96
      %p105 = scmp.eq.s32.totalorder %s22, 0
      %p106 = por %p104, %p105
      %p107 = scmp.ne.s32.totalorder %s95, %s96
      %p108 = scmp.eq.s32.totalorder %s23, 1
      %p109 = por %p107, %p108
      %p111 = scmp.ne.s32.totalorder %s96, %s110
      %p112 = scmp.eq.s32.totalorder %s23, 0
      %p113 = por %p111, %p112
      %s115 = sadd.s32 %s114, 1
      %p118 = scmp.eq.s32.totalorder %s17, 1
      %p119 = scmp.ne.s32.totalorder %s114, %s116
      %p120 = scmp.eq.s32.totalorder %s17, 0
      %p121 = por %p119, %p120
      %p122 = scmp.ne.s32.totalorder %s114, %s116
      %p123 = scmp.eq.s32.totalorder %s22, 1
      %p124 = por %p122, %p123
      %p125 = scmp.ne.s32.totalorder %s116, %s117
      %p126 = scmp.eq.s32.totalorder %s22, 0
      %p127 = por %p125, %p126
      %p128 = scmp.ne.s32.totalorder %s116, %s117
      %p129 = scmp.eq.s32.totalorder %s23, 1
      %p130 = por %p128, %p129
      %p132 = scmp.ne.s32.totalorder %s117, %s131
      %p133 = scmp.eq.s32.totalorder %s23, 0
      %p134 = por %p132, %p133
      %s136 = sadd.s32 %s135, 1
      %p139 = scmp.eq.s32.totalorder %s17, 1
      %p140 = scmp.ne.s32.totalorder %s135, %s137
      %p141 = scmp.eq.s32.totalorder %s17, 0
      %p142 = por %p140, %p141
      %p143 = scmp.ne.s32.totalorder %s135, %s137
      %p144 = scmp.eq.s32.totalorder %s22, 1
      %p145 = por %p143, %p144
      %p146 = scmp.ne.s32.totalorder %s137, %s138
      %p147 = scmp.eq.s32.totalorder %s22, 0
      %p148 = por %p146, %p147
      %p149 = scmp.ne.s32.totalorder %s137, %s138
      %p150 = scmp.eq.s32.totalorder %s23, 1
      %p151 = por %p149, %p150
      %p153 = scmp.ne.s32.totalorder %s138, %s152
      %p154 = scmp.eq.s32.totalorder %s23, 0
      %p155 = por %p153, %p154
      %s157 = sadd.s32 %s156, 1
      %p160 = scmp.eq.s32.totalorder %s17, 1
      %p161 = scmp.ne.s32.totalorder %s156, %s158
      %p162 = scmp.eq.s32.totalorder %s17, 0
      %p163 = por %p161, %p162
      %p164 = scmp.ne.s32.totalorder %s156, %s158
      %p165 = scmp.eq.s32.totalorder %s22, 1
      %p166 = por %p164, %p165
      %p167 = scmp.ne.s32.totalorder %s158, %s159
      %p168 = scmp.eq.s32.totalorder %s22, 0
      %p169 = por %p167, %p168
      %p170 = scmp.ne.s32.totalorder %s158, %s159
      %p171 = scmp.eq.s32.totalorder %s23, 1
      %p172 = por %p170, %p171
      %p174 = scmp.ne.s32.totalorder %s159, %s173
      %p175 = scmp.eq.s32.totalorder %s23, 0
      %p176 = por %p174, %p175
      %s178 = sadd.s32 %s177, 1
      %p181 = scmp.eq.s32.totalorder %s17, 1
      %p182 = scmp.ne.s32.totalorder %s177, %s179
      %p183 = scmp.eq.s32.totalorder %s17, 0
      %p184 = por %p182, %p183
      %p185 = scmp.ne.s32.totalorder %s177, %s179
      %p186 = scmp.eq.s32.totalorder %s22, 1
      %p187 = por %p185, %p186
      %p188 = scmp.ne.s32.totalorder %s179, %s180
      %p189 = scmp.eq.s32.totalorder %s22, 0
      %p190 = por %p188, %p189
      %p191 = scmp.ne.s32.totalorder %s179, %s180
      %p192 = scmp.eq.s32.totalorder %s23, 1
      %p193 = por %p191, %p192
      %p195 = scmp.ne.s32.totalorder %s180, %s194
      %p196 = scmp.eq.s32.totalorder %s23, 0
      %p197 = por %p195, %p196
      %s198 = ssub.s32 %s17, %s24
      %p199 = scmp.eq.s32.totalorder %s198, 0
      %s201 = sadd.s32 %s200, 1
      %s202 = scalar_select %p199, %s200, %s201
      %p205 = pneg %p199
      %p206 = scmp.eq.s32.totalorder %s17, 1
      %p207 = por %p205, %p206
      %p208 = scmp.ne.s32.totalorder %s200, %s203
      %p209 = scmp.eq.s32.totalorder %s17, 0
      %p210 = por %p208, %p209
      %p211 = scmp.ne.s32.totalorder %s200, %s203
      %p212 = scmp.eq.s32.totalorder %s22, 1
      %p213 = por %p211, %p212
      %p214 = scmp.ne.s32.totalorder %s203, %s204
      %p215 = scmp.eq.s32.totalorder %s22, 0
      %p216 = por %p214, %p215
      %p217 = scmp.ne.s32.totalorder %s203, %s204
      %p218 = scmp.eq.s32.totalorder %s23, 1
      %p219 = por %p217, %p218
      %p221 = scmp.ne.s32.totalorder %s204, %s220
      %p222 = scmp.eq.s32.totalorder %s23, 0
      %p223 = por %p221, %p222
      %p224 = scmp.le.s32.totalorder 1, %s17
      %p225 = scmp.lt.s32.totalorder %s17, 3
      %p226 = pnand %p224, %p225
      %p227 = pneg %p226
      // Predicated region
      $region9: #{tpu_custom_call.1} parent=5 // pred_check
        _
      $region10: #{tpu_custom_call.1} parent=5 // pred_check_branch
        %229 = sbr.rel (%p226) target = $region12
      $region11: #{tpu_custom_call.1} parent=5 // pred_region
        %s230 = ssub.s32 %s17, 1
        // Predicated region
        $region13: #{tpu_custom_call.1} parent=11 // pred_check
          %p231 = pneg %p64
        $region14: #{tpu_custom_call.1} parent=11 // pred_check_branch
          %233 = sbr.rel (%p231) target = $region16
        $region15: #{tpu_custom_call.1} parent=11 // pred_region
          _
        $region16: #{tpu_custom_call.1} parent=11 // pred_fallthru
          _
        // Predicated region
        $region17: #{tpu_custom_call.1} parent=11 // pred_check
          %p234 = pneg %p85
        $region18: #{tpu_custom_call.1} parent=11 // pred_check_branch
          %236 = sbr.rel (%p234) target = $region20
        $region19: #{tpu_custom_call.1} parent=11 // pred_region
          _
        $region20: #{tpu_custom_call.1} parent=11 // pred_fallthru
          _
        // Predicated region
        $region21: #{tpu_custom_call.1} parent=11 // pred_check
          %p237 = pneg %p106
        $region22: #{tpu_custom_call.1} parent=11 // pred_check_branch
          %239 = sbr.rel (%p237) target = $region24
        $region23: #{tpu_custom_call.1} parent=11 // pred_region
          _
        $region24: #{tpu_custom_call.1} parent=11 // pred_fallthru
          _
        // Predicated region
        $region25: #{tpu_custom_call.1} parent=11 // pred_check
          %p240 = pneg %p127
        $region26: #{tpu_custom_call.1} parent=11 // pred_check_branch
          %242 = sbr.rel (%p240) target = $region28
        $region27: #{tpu_custom_call.1} parent=11 // pred_region
          _
        $region28: #{tpu_custom_call.1} parent=11 // pred_fallthru
          _
        // Predicated region
        $region29: #{tpu_custom_call.1} parent=11 // pred_check
          %p243 = pneg %p148
        $region30: #{tpu_custom_call.1} parent=11 // pred_check_branch
          %245 = sbr.rel (%p243) target = $region32
        $region31: #{tpu_custom_call.1} parent=11 // pred_region
          _
        $region32: #{tpu_custom_call.1} parent=11 // pred_fallthru
          _
        // Predicated region
        $region33: #{tpu_custom_call.1} parent=11 // pred_check
          %p246 = pneg %p169
        $region34: #{tpu_custom_call.1} parent=11 // pred_check_branch
          %248 = sbr.rel (%p246) target = $region36
        $region35: #{tpu_custom_call.1} parent=11 // pred_region
          _
        $region36: #{tpu_custom_call.1} parent=11 // pred_fallthru
          _
        // Predicated region
        $region37: #{tpu_custom_call.1} parent=11 // pred_check
          %p249 = pneg %p190
        $region38: #{tpu_custom_call.1} parent=11 // pred_check_branch
          %251 = sbr.rel (%p249) target = $region40
        $region39: #{tpu_custom_call.1} parent=11 // pred_region
          _
        $region40: #{tpu_custom_call.1} parent=11 // pred_fallthru
          _
      $region12: #{tpu_custom_call.1} parent=5 // pred_fallthru
        _
      %p252 = scmp.lt.s32.totalorder %s17, 2
      // Predicated region
      $region41: #{tpu_custom_call.1} parent=5 // pred_check
        %p253 = pneg %p252
      $region42: #{tpu_custom_call.1} parent=5 // pred_check_branch
        %255 = sbr.rel (%p253) target = $region44
      $region43: #{tpu_custom_call.1} parent=5 // pred_region
        // Predicated region
        $region45: #{tpu_custom_call.1} parent=43 // pred_check
          %p256 = pneg %p37
        $region46: #{tpu_custom_call.1} parent=43 // pred_check_branch
          %258 = sbr.rel (%p256) target = $region48
        $region47: #{tpu_custom_call.1} parent=43 // pred_region
          %s259 = sand.u32 %s27, 1
          %s260 = sand.u32 %s27, 1
          %s261 = smul.addr %s260, 40
          %s262 = scalar_lea.vmem [#allocation2], %s261
          %s263 = smul.addr %s17, 8
          %s264 = scalar_lea.vmem %s0, %s263
          // Predicated region
          $region49: #{tpu_custom_call.1} parent=47 // pred_check
            _
          $region50: #{tpu_custom_call.1} parent=47 // pred_check_branch
            %266 = sbr.rel (0) target = $region52
          $region51: #{tpu_custom_call.1} parent=47 // pred_region
            // Predicated region
            $region53: #{tpu_custom_call.1} parent=51 // pred_check
              _
            $region54: #{tpu_custom_call.1} parent=51 // pred_check_branch
              %268 = sbr.rel (0) target = $region56
            $region55: #{tpu_custom_call.1} parent=51 // pred_region
              // Predicated region
              $region68: #{tpu_custom_call.1} parent=55 // pred_check
                _
              $region69: #{tpu_custom_call.1} parent=55 // pred_check_branch
                %292 = sbr.rel (0) target = $region71
              $region70: #{tpu_custom_call.1} parent=55 // pred_region
                loop: start=0, step=1, limit=1
                $region72: #{tpu_custom_call.1} parent=70 // loop_pre_header
                  _
                $region73: #{tpu_custom_call.1} parent=70 // loop_header
                  %s294 = sphi 0, %s298
                  %p295 = scmp.ge.s32.totalorder %s294, 1
                  %s299 = sphi %s264, %s264
                  %s300 = sphi %s262, %s262
                $region74: #{tpu_custom_call.1} parent=70 // loop_header_branch
                  %297 = sbr.rel (%p295) target = $region78
                $region75: #{tpu_custom_call.1} parent=70 // loop_body
                  %v301 = vld [vmem:[%s299] sm:$0xff]
                  %302 = vst [vmem:[%s300] sm:$0xff] %v301
                  %v303 = vld [vmem:[%s299 + $0x10] sm:$0xff]
                  %304 = vst [vmem:[%s300 + $0x8] sm:$0xff] %v303
                  %v305 = vld [vmem:[%s299 + $0x20] sm:$0xff]
                  %306 = vst [vmem:[%s300 + $0x10] sm:$0xff] %v305
                  %v307 = vld [vmem:[%s299 + $0x30] sm:$0xff]
                  %308 = vst [vmem:[%s300 + $0x18] sm:$0xff] %v307
                  %v309 = vld [vmem:[%s299 + $0x40] sm:$0xff]
                  %310 = vst [vmem:[%s300 + $0x20] sm:$0xff] %v309
                $region76: #{tpu_custom_call.1} parent=70 // loop_footer
                  %s298 = sadd.s32 1, %s294
                $region77: #{tpu_custom_call.1} parent=70 // loop_footer_branch
                  %293 = sbr.rel target = $region73
                $region78: #{tpu_custom_call.1} parent=70 // loop_exit
                  _
              $region71: #{tpu_custom_call.1} parent=55 // pred_fallthru
                _
              // Predicated region
              $region79: #{tpu_custom_call.1} parent=55 // pred_check
                _
              $region80: #{tpu_custom_call.1} parent=55 // pred_check_branch
                %312 = sbr.rel target = $region82
              $region81: #{tpu_custom_call.1} parent=55 // pred_region
                _
              $region82: #{tpu_custom_call.1} parent=55 // pred_fallthru
                _
            $region56: #{tpu_custom_call.1} parent=51 // pred_fallthru
              _
            // Predicated region
            $region57: #{tpu_custom_call.1} parent=51 // pred_check
              _
            $region58: #{tpu_custom_call.1} parent=51 // pred_check_branch
              %270 = sbr.rel target = $region60
            $region59: #{tpu_custom_call.1} parent=51 // pred_region
              %s272 = ssub.s32 256, 1
              loop: start=0, step=1, limit=1
              $region61: #{tpu_custom_call.1} parent=59 // loop_pre_header
                _
              $region62: #{tpu_custom_call.1} parent=59 // loop_header
                %s274 = sphi 0, %s278
                %p275 = scmp.ge.s32.totalorder %s274, 1
                %s279 = sphi %s264, %s264
                %s280 = sphi %s262, %s262
              $region63: #{tpu_custom_call.1} parent=59 // loop_header_branch
                %277 = sbr.rel (%p275) target = $region67
              $region64: #{tpu_custom_call.1} parent=59 // loop_body
                %v281 = vld [vmem:[%s279] sm:%s272]
                %282 = vst [vmem:[%s280] sm:%s272] %v281
                %v283 = vld [vmem:[%s279 + $0x10] sm:%s272]
                %284 = vst [vmem:[%s280 + $0x8] sm:%s272] %v283
                %v285 = vld [vmem:[%s279 + $0x20] sm:%s272]
                %286 = vst [vmem:[%s280 + $0x10] sm:%s272] %v285
                %v287 = vld [vmem:[%s279 + $0x30] sm:%s272]
                %288 = vst [vmem:[%s280 + $0x18] sm:%s272] %v287
                %v289 = vld [vmem:[%s279 + $0x40] sm:%s272]
                %290 = vst [vmem:[%s280 + $0x20] sm:%s272] %v289
              $region65: #{tpu_custom_call.1} parent=59 // loop_footer
                %s278 = sadd.s32 1, %s274
              $region66: #{tpu_custom_call.1} parent=59 // loop_footer_branch
                %273 = sbr.rel target = $region62
              $region67: #{tpu_custom_call.1} parent=59 // loop_exit
                _
            $region60: #{tpu_custom_call.1} parent=51 // pred_fallthru
              _
          $region52: #{tpu_custom_call.1} parent=47 // pred_fallthru
            _
          %313 = vnop
        $region48: #{tpu_custom_call.1} parent=43 // pred_fallthru
          _
      $region44: #{tpu_custom_call.1} parent=5 // pred_fallthru
        _
      %p314 = scmp.le.s32.totalorder 1, %s17
      %p315 = scmp.lt.s32.totalorder %s17, 3
      %p316 = pnand %p314, %p315
      %p317 = pneg %p316
      // Predicated region
      $region83: #{tpu_custom_call.1} parent=5 // pred_check
        _
      $region84: #{tpu_custom_call.1} parent=5 // pred_check_branch
        %319 = sbr.rel (%p316) target = $region86
      $region85: #{tpu_custom_call.1} parent=5 // pred_region
        %s320 = ssub.s32 %s17, 1
        %s321 = sand.u32 %s30, 1
        %s322 = sand.u32 %s30, 1
        %s323 = smul.addr %s322, 40
        %s324 = scalar_lea.vmem [#allocation2], %s323
        // Predicated region
        $region87: #{tpu_custom_call.1} parent=85 // pred_check
          %p325 = pneg %p43
        $region88: #{tpu_custom_call.1} parent=85 // pred_check_branch
          %327 = sbr.rel (%p325) target = $region90
        $region89: #{tpu_custom_call.1} parent=85 // pred_region
          _
        $region90: #{tpu_custom_call.1} parent=85 // pred_fallthru
          _
        %s328 = sand.u32 %s30, 1
        %s329 = sand.u32 %s30, 1
        %s330 = smul.addr %s329, 40
        %s331 = scalar_lea.vmem [#allocation2], %s330
        %p332 = pneg %p43
        %p333 = pneg %p40
        %p334 = pneg %p64
        %p335 = pneg %p61
        %p336 = pneg %p85
        %p337 = pneg %p82
        %p338 = pneg %p106
        %p339 = pneg %p103
        %p340 = pneg %p127
        %p341 = pneg %p124
        %p342 = pneg %p148
        %p343 = pneg %p145
        %p344 = pneg %p169
        %p345 = pneg %p166
        %p346 = pneg %p190
        %p347 = pneg %p187
        %p348 = pneg %p216
        %p349 = pneg %p213
        %s350 = sand.u32 %s203, 1
        %s351 = scalar_lea.sflag [#allocation4], %s350
        %s352 = sand.u32 %s203, 1
        %s353 = smul.addr %s352, 16
        %s354 = scalar_lea.vmem [#allocation3], %s353
        %v355 = vld [vmem:[%s324] sm:$0xff]
        %v356 = vld [vmem:[%s324 + $0x8] sm:$0xff]
        %v357 = vld [vmem:[%s324 + $0x10] sm:$0xff]
        %v358 = vld [vmem:[%s324 + $0x18] sm:$0xff]
        %v359 = vld [vmem:[%s324 + $0x20] sm:$0x1]
        %v360 = vld [vmem:[%s324 + $0x21] sm:$0x1]
        %v361 = vmul.f32 %v357, %v357
        %v362 = vmul.f32 %v358, %v358
        %vm363 = vcmask 130048
        %v365 = vsel %vm363, 1.0, 0
        %367 = vmatprep.subr.mxu0 0.0
        %368 = vmatpush1.msra.mxu0 0.0
        %369 = vmatprep.subr.mxu0 0.0
        %370 = vmatpush1.msra.mxu0 0.0
        %371 = vmatprep.subr.mxu0 0.0
        %372 = vmatpush1.msra.mxu0 0.0
        %373 = vmatprep.subr.mxu0 0.0
        %374 = vmatpush1.msra.mxu0 0.0
        %375 = vmatprep.subr.mxu0 0.0
        %376 = vmatpush1.msra.mxu0 0.0
        %377 = vmatprep.subr.mxu0 0.0
        %378 = vmatpush1.msra.mxu0 0.0
        %379 = vmatprep.subr.mxu0 0.0
        %380 = vmatpush1.msra.mxu0 0.0
        %381 = vmatprep.subr.mxu0 0.0
        %382 = vmatpush1.msra.mxu0 0.0
        %383 = vmatprep.subr.mxu0 0.0
        %384 = vmatpush1.msra.mxu0 0.0
        %385 = vmatprep.subr.mxu0 0.0
        %386 = vmatpush1.msra.mxu0 0.0
        %387 = vmatprep.subr.mxu0 0.0
        %388 = vmatpush1.msra.mxu0 0.0
        %389 = vmatprep.subr.mxu0 0.0
        %390 = vmatpush1.msra.mxu0 0.0
        %391 = vmatprep.subr.mxu0 0.0
        %392 = vmatpush1.msra.mxu0 0.0
        %393 = vmatprep.subr.mxu0 0.0
        %394 = vmatpush1.msra.mxu0 0.0
        %395 = vmatprep.subr.mxu0 0.0
        %396 = vmatpush1.msra.mxu0 %v362
        %397 = vmatprep.subr.mxu0 0.0
        %398 = vmatpush1.msra.mxu0 %v361
        %399 = vmatprep.subr.mxu0 0.0
        %400 = vmatpush2.msra.mxu0 0.0
        %401 = vmatprep.subr.mxu0 0.0
        %402 = vmatpush2.msra.mxu0 0.0
        %403 = vmatprep.subr.mxu0 0.0
        %404 = vmatpush2.msra.mxu0 0.0
        %405 = vmatprep.subr.mxu0 0.0
        %406 = vmatpush2.msra.mxu0 0.0
        %407 = vmatprep.subr.mxu0 0.0
        %408 = vmatpush2.msra.mxu0 0.0
        %409 = vmatprep.subr.mxu0 0.0
        %410 = vmatpush2.msra.mxu0 0.0
        %411 = vmatprep.subr.mxu0 0.0
        %412 = vmatpush2.msra.mxu0 0.0
        %413 = vmatprep.subr.mxu0 0.0
        %414 = vmatpush2.msra.mxu0 0.0
        %415 = vmatprep.subr.mxu0 0.0
        %416 = vmatpush2.msra.mxu0 0.0
        %417 = vmatprep.subr.mxu0 0.0
        %418 = vmatpush2.msra.mxu0 0.0
        %419 = vmatprep.subr.mxu0 0.0
        %420 = vmatpush2.msra.mxu0 0.0
        %421 = vmatprep.subr.mxu0 0.0
        %422 = vmatpush2.msra.mxu0 0.0
        %423 = vmatprep.subr.mxu0 0.0
        %424 = vmatpush2.msra.mxu0 0.0
        %425 = vmatprep.subr.mxu0 0.0
        %426 = vmatpush2.msra.mxu0 0.0
        %427 = vmatprep.subr.mxu0 0.0
        %428 = vmatpush2.msra.mxu0 0.0
        %429 = vmatprep.subr.mxu0 0.0
        %430 = vmatpush2.msra.mxu0 0.0
        %431 = vmatprep.mubr.f32.mxu0 0.0
        %432 = vmatmul.mubr.f32.gmra.mxu0 %v365
        %v433 = vpop.f32.mrf.mxu0
        %v434 = vadd.f32 0.0, %v433
        %v435 = vpop.f32.mrf.mxu0
        %436 = vdwg.mxu0
        %v437 = vmul.f32 %v357, %v355
        %v438 = vmul.f32 %v358, %v356
        %439 = vmatprep.subr.mxu0 0.0
        %440 = vmatpush1.msra.mxu0 0.0
        %441 = vmatprep.subr.mxu0 0.0
        %442 = vmatpush1.msra.mxu0 0.0
        %443 = vmatprep.subr.mxu0 0.0
        %444 = vmatpush1.msra.mxu0 0.0
        %445 = vmatprep.subr.mxu0 0.0
        %446 = vmatpush1.msra.mxu0 0.0
        %447 = vmatprep.subr.mxu0 0.0
        %448 = vmatpush1.msra.mxu0 0.0
        %449 = vmatprep.subr.mxu0 0.0
        %450 = vmatpush1.msra.mxu0 0.0
        %451 = vmatprep.subr.mxu0 0.0
        %452 = vmatpush1.msra.mxu0 0.0
        %453 = vmatprep.subr.mxu0 0.0
        %454 = vmatpush1.msra.mxu0 0.0
        %455 = vmatprep.subr.mxu0 0.0
        %456 = vmatpush1.msra.mxu0 0.0
        %457 = vmatprep.subr.mxu0 0.0
        %458 = vmatpush1.msra.mxu0 0.0
        %459 = vmatprep.subr.mxu0 0.0
        %460 = vmatpush1.msra.mxu0 0.0
        %461 = vmatprep.subr.mxu0 0.0
        %462 = vmatpush1.msra.mxu0 0.0
        %463 = vmatprep.subr.mxu0 0.0
        %464 = vmatpush1.msra.mxu0 0.0
        %465 = vmatprep.subr.mxu0 0.0
        %466 = vmatpush1.msra.mxu0 0.0
        %467 = vmatprep.subr.mxu0 0.0
        %468 = vmatpush1.msra.mxu0 %v438
        %469 = vmatprep.subr.mxu0 0.0
        %470 = vmatpush1.msra.mxu0 %v437
        %471 = vmatprep.subr.mxu0 0.0
        %472 = vmatpush2.msra.mxu0 0.0
        %473 = vmatprep.subr.mxu0 0.0
        %474 = vmatpush2.msra.mxu0 0.0
        %475 = vmatprep.subr.mxu0 0.0
        %476 = vmatpush2.msra.mxu0 0.0
        %477 = vmatprep.subr.mxu0 0.0
        %478 = vmatpush2.msra.mxu0 0.0
        %479 = vmatprep.subr.mxu0 0.0
        %480 = vmatpush2.msra.mxu0 0.0
        %481 = vmatprep.subr.mxu0 0.0
        %482 = vmatpush2.msra.mxu0 0.0
        %483 = vmatprep.subr.mxu0 0.0
        %484 = vmatpush2.msra.mxu0 0.0
        %485 = vmatprep.subr.mxu0 0.0
        %486 = vmatpush2.msra.mxu0 0.0
        %487 = vmatprep.subr.mxu0 0.0
        %488 = vmatpush2.msra.mxu0 0.0
        %489 = vmatprep.subr.mxu0 0.0
        %490 = vmatpush2.msra.mxu0 0.0
        %491 = vmatprep.subr.mxu0 0.0
        %492 = vmatpush2.msra.mxu0 0.0
        %493 = vmatprep.subr.mxu0 0.0
        %494 = vmatpush2.msra.mxu0 0.0
        %495 = vmatprep.subr.mxu0 0.0
        %496 = vmatpush2.msra.mxu0 0.0
        %497 = vmatprep.subr.mxu0 0.0
        %498 = vmatpush2.msra.mxu0 0.0
        %499 = vmatprep.subr.mxu0 0.0
        %500 = vmatpush2.msra.mxu0 0.0
        %501 = vmatprep.subr.mxu0 0.0
        %502 = vmatpush2.msra.mxu0 0.0
        %503 = vmatprep.mubr.f32.mxu0 0.0
        %504 = vmatmul.mubr.f32.gmra.mxu0 %v365
        %v505 = vpop.f32.mrf.mxu0
        %v506 = vadd.f32 0.0, %v505
        %v507 = vpop.f32.mrf.mxu0
        %508 = vdwg.mxu0
        %v509 = vrsqrt.pop %v359
        %v510 = vmul.f32 %v359, %v509
        %vm511 = vcmp.eq.f32.partialorder %v359, inf
        %v512 = vsel %vm511, %v359, %v510
        %vm513 = vcmp.eq.f32.partialorder %v359, 0.0
        %v514 = vand.u32 %v359, 2147483648
        %v515 = vsel %vm513, %v514, %v512
        %v516 = vadd.f32 %v515, 1e-07
        %v517 = vrcp.pop %v516
        %v518 = vmul.f32 %v359, %v434
        %v519 = vsub.f32 1.0, %v518
        %v520 = vadd.f32 %v519, 1e-07
        %v521 = vmul.f32 %v520, %v520
        %v522 = vadd.f32 %v521, 1e-07
        %v523 = vrcp.pop %v522
        %v524 = vmul.f32 %v359, 4.0
        %v525 = vmul.f32 %v524, %v517
        %v526 = vmul.f32 %v525, %v506
        %v527 = vmul.f32 %v526, %v523
        %v528 = vmul.f32 %v517, 2.0
        %v529 = vmul.f32 %v528, %v523
        %v530 = vlaneseq
        %v531 = vshrl.u32 %v530, 7
        %v532 = vsub.s32 0, %v531
        %v533 = vrot.slane %v519, %v532
        %v534 = vmul.f32 %v533, %v355
        %v535 = vmul.f32 %v533, %v356
        %v536 = vmul.f32 %v359, 2.0
        %v537 = vmul.f32 %v536, %v506
        %v538 = vlaneseq
        %v539 = vshrl.u32 %v538, 7
        %v540 = vsub.s32 0, %v539
        %v541 = vrot.slane %v537, %v540
        %v542 = vmul.f32 %v541, %v357
        %v543 = vmul.f32 %v541, %v358
        %v544 = vadd.f32 %v534, %v542
        %v545 = vadd.f32 %v535, %v543
        %v546 = vlaneseq
        %v547 = vshrl.u32 %v546, 7
        %v548 = vsub.s32 0, %v547
        %v549 = vrot.slane %v529, %v548
        %v550 = vmul.f32 %v549, %v544
        %v551 = vmul.f32 %v549, %v545
        %v552 = vld [vmem:[%s2] sm:$0xff]
        %v553 = vld [vmem:[%s2 + $0x8] sm:$0xff]
        %v554 = vld [vmem:[%s2 + $0x10] sm:$0x1]
        %v555 = vld [vmem:[%s1] sm:$0xff]
        %v556 = vld [vmem:[%s1 + $0x8] sm:$0xff]
        %v557 = vld [vmem:[%s1 + $0x10] sm:$0x1]
        %559 = vset.pattern.permute.xlu0 0
        %560 = vperm.xlu0 %559, %v555
        %v561 = vpop.permute.xlu0 %560
        %564 = vset.pattern.permute.xlu0 0
        %565 = vperm.xlu0 %564, %v556
        %v566 = vpop.permute.xlu0 %565
        %569 = vset.pattern.permute.xlu0 0
        %570 = vperm.xlu0 %569, %v557
        %v571 = vpop.permute.xlu0 %570
        %v573 = vlaneseq
        %v574 = vshrl.u32 %v573, 7
        %v575 = vsub.s32 0, %v574
        %v576 = vrot.slane %v527, %v575
        %v577 = vmul.f32 %v561, %v576
        %v578 = vmul.f32 %v566, %v576
        %v579 = vmul.f32 %v571, %v576
        %v581 = vsel %vm363, %v552, 0
        %v584 = vsel %vm363, %v553, 0
        %v587 = vsel %vm363, %v554, 0
        %589 = vmatprep.subr.mxu0 0.0
        %590 = vmatpush1.msra.mxu0 0.0
        %591 = vmatprep.subr.mxu0 0.0
        %592 = vmatpush1.msra.mxu0 0.0
        %593 = vmatprep.subr.mxu0 0.0
        %594 = vmatpush1.msra.mxu0 0.0
        %595 = vmatprep.subr.mxu0 0.0
        %596 = vmatpush1.msra.mxu0 0.0
        %597 = vmatprep.subr.mxu0 0.0
        %598 = vmatpush1.msra.mxu0 0.0
        %599 = vmatprep.subr.mxu0 0.0
        %600 = vmatpush1.msra.mxu0 0.0
        %601 = vmatprep.subr.mxu0 0.0
        %602 = vmatpush1.msra.mxu0 0.0
        %603 = vmatprep.subr.mxu0 0.0
        %604 = vmatpush1.msra.mxu0 0.0
        %605 = vmatprep.subr.mxu0 0.0
        %606 = vmatpush1.msra.mxu0 0.0
        %607 = vmatprep.subr.mxu0 0.0
        %608 = vmatpush1.msra.mxu0 0.0
        %609 = vmatprep.subr.mxu0 0.0
        %610 = vmatpush1.msra.mxu0 0.0
        %611 = vmatprep.subr.mxu0 0.0
        %612 = vmatpush1.msra.mxu0 0.0
        %613 = vmatprep.subr.mxu0 0.0
        %614 = vmatpush1.msra.mxu0 0.0
        %615 = vmatprep.subr.mxu0 0.0
        %616 = vmatpush1.msra.mxu0 0.0
        %617 = vmatprep.subr.mxu0 0.0
        %618 = vmatpush1.msra.mxu0 %v551
        %619 = vmatprep.subr.mxu0 0.0
        %620 = vmatpush1.msra.mxu0 %v550
        %621 = vmatprep.subr.mxu0 0.0
        %622 = vmatpush2.msra.mxu0 0.0
        %623 = vmatprep.subr.mxu0 0.0
        %624 = vmatpush2.msra.mxu0 0.0
        %625 = vmatprep.subr.mxu0 0.0
        %626 = vmatpush2.msra.mxu0 0.0
        %627 = vmatprep.subr.mxu0 0.0
        %628 = vmatpush2.msra.mxu0 0.0
        %629 = vmatprep.subr.mxu0 0.0
        %630 = vmatpush2.msra.mxu0 0.0
        %631 = vmatprep.subr.mxu0 0.0
        %632 = vmatpush2.msra.mxu0 0.0
        %633 = vmatprep.subr.mxu0 0.0
        %634 = vmatpush2.msra.mxu0 0.0
        %635 = vmatprep.subr.mxu0 0.0
        %636 = vmatpush2.msra.mxu0 0.0
        %637 = vmatprep.subr.mxu0 0.0
        %638 = vmatpush2.msra.mxu0 0.0
        %639 = vmatprep.subr.mxu0 0.0
        %640 = vmatpush2.msra.mxu0 0.0
        %641 = vmatprep.subr.mxu0 0.0
        %642 = vmatpush2.msra.mxu0 0.0
        %643 = vmatprep.subr.mxu0 0.0
        %644 = vmatpush2.msra.mxu0 0.0
        %645 = vmatprep.subr.mxu0 0.0
        %646 = vmatpush2.msra.mxu0 0.0
        %647 = vmatprep.subr.mxu0 0.0
        %648 = vmatpush2.msra.mxu0 0.0
        %649 = vmatprep.subr.mxu0 0.0
        %650 = vmatpush2.msra.mxu0 0.0
        %651 = vmatprep.subr.mxu0 0.0
        %652 = vmatpush2.msra.mxu0 0.0
        %653 = vmatprep.mubr.f32.mxu0 0.0
        %654 = vmatmul.mubr.f32.gmra.mxu0 %v581
        %v655 = vpop.f32.mrf.mxu0
        %v656 = vadd.f32 %v577, %v655
        %v657 = vpop.f32.mrf.mxu0
        %658 = vmatprep.mubr.f32.mxu0 0.0
        %659 = vmatmul.mubr.f32.gmra.mxu0 %v584
        %v660 = vpop.f32.mrf.mxu0
        %v661 = vadd.f32 %v578, %v660
        %v662 = vpop.f32.mrf.mxu0
        %663 = vmatprep.mubr.f32.mxu0 0.0
        %664 = vmatmul.mubr.f32.gmra.mxu0 %v587
        %v665 = vpop.f32.mrf.mxu0
        %v666 = vadd.f32 %v579, %v665
        %v667 = vpop.f32.mrf.mxu0
        %668 = vdwg.mxu0
        %v669 = vld [vmem:[%s3] sm:$0xff]
        %v670 = vld [vmem:[%s3 + $0x8] sm:$0xff]
        %v671 = vld [vmem:[%s3 + $0x10] sm:$0x1]
        %673 = vset.pattern.permute.xlu0 0
        %674 = vperm.xlu0 %673, %v669
        %v675 = vpop.permute.xlu0 %674
        %678 = vset.pattern.permute.xlu0 0
        %679 = vperm.xlu0 %678, %v670
        %v680 = vpop.permute.xlu0 %679
        %683 = vset.pattern.permute.xlu0 0
        %684 = vperm.xlu0 %683, %v671
        %v685 = vpop.permute.xlu0 %684
        %v687 = vadd.f32 %v656, %v675
        %v688 = vadd.f32 %v661, %v680
        %v689 = vadd.f32 %v666, %v685
        %vm690 = vcmask 138240
        %v691 = vsel %vm690, 1.0, 0
        %vm693 = vcmask 1040384
        %v695 = vsel %vm693, %v689, 0
        %697 = vmatprep.subr.mxu0 0.0
        %698 = vmatpush1.msra.mxu0 0.0
        %699 = vmatprep.subr.mxu0 0.0
        %700 = vmatpush1.msra.mxu0 0.0
        %701 = vmatprep.subr.mxu0 0.0
        %702 = vmatpush1.msra.mxu0 0.0
        %703 = vmatprep.subr.mxu0 0.0
        %704 = vmatpush1.msra.mxu0 0.0
        %705 = vmatprep.subr.mxu0 0.0
        %706 = vmatpush1.msra.mxu0 0.0
        %707 = vmatprep.subr.mxu0 0.0
        %708 = vmatpush1.msra.mxu0 0.0
        %709 = vmatprep.subr.mxu0 0.0
        %710 = vmatpush1.msra.mxu0 0.0
        %711 = vmatprep.subr.mxu0 0.0
        %712 = vmatpush1.msra.mxu0 0.0
        %713 = vmatprep.subr.mxu0 0.0
        %714 = vmatpush1.msra.mxu0 0.0
        %715 = vmatprep.subr.mxu0 0.0
        %716 = vmatpush1.msra.mxu0 0.0
        %717 = vmatprep.subr.mxu0 0.0
        %718 = vmatpush1.msra.mxu0 0.0
        %719 = vmatprep.subr.mxu0 0.0
        %720 = vmatpush1.msra.mxu0 0.0
        %721 = vmatprep.subr.mxu0 0.0
        %722 = vmatpush1.msra.mxu0 0.0
        %723 = vmatprep.subr.mxu0 0.0
        %724 = vmatpush1.msra.mxu0 %v695
        %725 = vmatprep.subr.mxu0 0.0
        %726 = vmatpush1.msra.mxu0 %v688
        %727 = vmatprep.subr.mxu0 0.0
        %728 = vmatpush1.msra.mxu0 %v687
        %729 = vmatprep.subr.mxu0 0.0
        %730 = vmatpush2.msra.mxu0 0.0
        %731 = vmatprep.subr.mxu0 0.0
        %732 = vmatpush2.msra.mxu0 0.0
        %733 = vmatprep.subr.mxu0 0.0
        %734 = vmatpush2.msra.mxu0 0.0
        %735 = vmatprep.subr.mxu0 0.0
        %736 = vmatpush2.msra.mxu0 0.0
        %737 = vmatprep.subr.mxu0 0.0
        %738 = vmatpush2.msra.mxu0 0.0
        %739 = vmatprep.subr.mxu0 0.0
        %740 = vmatpush2.msra.mxu0 0.0
        %741 = vmatprep.subr.mxu0 0.0
        %742 = vmatpush2.msra.mxu0 0.0
        %743 = vmatprep.subr.mxu0 0.0
        %744 = vmatpush2.msra.mxu0 0.0
        %745 = vmatprep.subr.mxu0 0.0
        %746 = vmatpush2.msra.mxu0 0.0
        %747 = vmatprep.subr.mxu0 0.0
        %748 = vmatpush2.msra.mxu0 0.0
        %749 = vmatprep.subr.mxu0 0.0
        %750 = vmatpush2.msra.mxu0 0.0
        %751 = vmatprep.subr.mxu0 0.0
        %752 = vmatpush2.msra.mxu0 0.0
        %753 = vmatprep.subr.mxu0 0.0
        %754 = vmatpush2.msra.mxu0 0.0
        %755 = vmatprep.subr.mxu0 0.0
        %756 = vmatpush2.msra.mxu0 0.0
        %757 = vmatprep.subr.mxu0 0.0
        %758 = vmatpush2.msra.mxu0 0.0
        %759 = vmatprep.subr.mxu0 0.0
        %760 = vmatpush2.msra.mxu0 0.0
        %761 = vmatprep.mubr.f32.mxu0 0.0
        %762 = vmatmul.mubr.f32.gmra.mxu0 %v691
        %v763 = vpop.f32.mrf.mxu0
        %v764 = vadd.f32 0.0, %v763
        %v765 = vpop.f32.mrf.mxu0
        %766 = vdwg.mxu0
        %v767 = vmul.f32 %v764, 0.05882353
        %v768 = vlaneseq
        %v769 = vshrl.u32 %v768, 7
        %v770 = vsub.s32 0, %v769
        %v771 = vrot.slane %v767, %v770
        %v772 = vsub.f32 %v687, %v771
        %v773 = vsub.f32 %v688, %v771
        %v774 = vsub.f32 %v689, %v771
        %v775 = vmul.f32 %v772, %v772
        %v776 = vmul.f32 %v773, %v773
        %v777 = vmul.f32 %v774, %v774
        %v779 = vsel %vm693, %v777, 0
        %781 = vmatprep.subr.mxu0 0.0
        %782 = vmatpush1.msra.mxu0 0.0
        %783 = vmatprep.subr.mxu0 0.0
        %784 = vmatpush1.msra.mxu0 0.0
        %785 = vmatprep.subr.mxu0 0.0
        %786 = vmatpush1.msra.mxu0 0.0
        %787 = vmatprep.subr.mxu0 0.0
        %788 = vmatpush1.msra.mxu0 0.0
        %789 = vmatprep.subr.mxu0 0.0
        %790 = vmatpush1.msra.mxu0 0.0
        %791 = vmatprep.subr.mxu0 0.0
        %792 = vmatpush1.msra.mxu0 0.0
        %793 = vmatprep.subr.mxu0 0.0
        %794 = vmatpush1.msra.mxu0 0.0
        %795 = vmatprep.subr.mxu0 0.0
        %796 = vmatpush1.msra.mxu0 0.0
        %797 = vmatprep.subr.mxu0 0.0
        %798 = vmatpush1.msra.mxu0 0.0
        %799 = vmatprep.subr.mxu0 0.0
        %800 = vmatpush1.msra.mxu0 0.0
        %801 = vmatprep.subr.mxu0 0.0
        %802 = vmatpush1.msra.mxu0 0.0
        %803 = vmatprep.subr.mxu0 0.0
        %804 = vmatpush1.msra.mxu0 0.0
        %805 = vmatprep.subr.mxu0 0.0
        %806 = vmatpush1.msra.mxu0 0.0
        %807 = vmatprep.subr.mxu0 0.0
        %808 = vmatpush1.msra.mxu0 %v779
        %809 = vmatprep.subr.mxu0 0.0
        %810 = vmatpush1.msra.mxu0 %v776
        %811 = vmatprep.subr.mxu0 0.0
        %812 = vmatpush1.msra.mxu0 %v775
        %813 = vmatprep.subr.mxu0 0.0
        %814 = vmatpush2.msra.mxu0 0.0
        %815 = vmatprep.subr.mxu0 0.0
        %816 = vmatpush2.msra.mxu0 0.0
        %817 = vmatprep.subr.mxu0 0.0
        %818 = vmatpush2.msra.mxu0 0.0
        %819 = vmatprep.subr.mxu0 0.0
        %820 = vmatpush2.msra.mxu0 0.0
        %821 = vmatprep.subr.mxu0 0.0
        %822 = vmatpush2.msra.mxu0 0.0
        %823 = vmatprep.subr.mxu0 0.0
        %824 = vmatpush2.msra.mxu0 0.0
        %825 = vmatprep.subr.mxu0 0.0
        %826 = vmatpush2.msra.mxu0 0.0
        %827 = vmatprep.subr.mxu0 0.0
        %828 = vmatpush2.msra.mxu0 0.0
        %829 = vmatprep.subr.mxu0 0.0
        %830 = vmatpush2.msra.mxu0 0.0
        %831 = vmatprep.subr.mxu0 0.0
        %832 = vmatpush2.msra.mxu0 0.0
        %833 = vmatprep.subr.mxu0 0.0
        %834 = vmatpush2.msra.mxu0 0.0
        %835 = vmatprep.subr.mxu0 0.0
        %836 = vmatpush2.msra.mxu0 0.0
        %837 = vmatprep.subr.mxu0 0.0
        %838 = vmatpush2.msra.mxu0 0.0
        %839 = vmatprep.subr.mxu0 0.0
        %840 = vmatpush2.msra.mxu0 0.0
        %841 = vmatprep.subr.mxu0 0.0
        %842 = vmatpush2.msra.mxu0 0.0
        %843 = vmatprep.subr.mxu0 0.0
        %844 = vmatpush2.msra.mxu0 0.0
        %845 = vmatprep.mubr.f32.mxu0 0.0
        %846 = vmatmul.mubr.f32.gmra.mxu0 %v691
        %v847 = vpop.f32.mrf.mxu0
        %v848 = vadd.f32 0.0, %v847
        %v849 = vpop.f32.mrf.mxu0
        %850 = vdwg.mxu0
        %v851 = vmul.f32 %v848, 0.05882353
        %v852 = vadd.f32 %v851, 1e-05
        %v853 = vrsqrt.pop %v852
        %v854 = vlaneseq
        %v855 = vshrl.u32 %v854, 7
        %v856 = vsub.s32 0, %v855
        %v857 = vrot.slane %v853, %v856
        %v858 = vmul.f32 %v772, %v857
        %v859 = vmul.f32 %v773, %v857
        %v860 = vmul.f32 %v774, %v857
        %v861 = vld [vmem:[%s4] sm:$0xff]
        %v862 = vld [vmem:[%s4 + $0x8] sm:$0xff]
        %v863 = vld [vmem:[%s4 + $0x10] sm:$0x1]
        %865 = vset.pattern.permute.xlu0 0
        %866 = vperm.xlu0 %865, %v861
        %v867 = vpop.permute.xlu0 %866
        %870 = vset.pattern.permute.xlu0 0
        %871 = vperm.xlu0 %870, %v862
        %v872 = vpop.permute.xlu0 %871
        %875 = vset.pattern.permute.xlu0 0
        %876 = vperm.xlu0 %875, %v863
        %v877 = vpop.permute.xlu0 %876
        %v879 = vmul.f32 %v858, %v867
        %v880 = vmul.f32 %v859, %v872
        %v881 = vmul.f32 %v860, %v877
        %v882 = vld [vmem:[%s5] sm:$0xff]
        %v883 = vld [vmem:[%s5 + $0x8] sm:$0xff]
        %v884 = vld [vmem:[%s5 + $0x10] sm:$0x1]
        %886 = vset.pattern.permute.xlu0 0
        %887 = vperm.xlu0 %886, %v882
        %v888 = vpop.permute.xlu0 %887
        %891 = vset.pattern.permute.xlu0 0
        %892 = vperm.xlu0 %891, %v883
        %v893 = vpop.permute.xlu0 %892
        %896 = vset.pattern.permute.xlu0 0
        %897 = vperm.xlu0 %896, %v884
        %v898 = vpop.permute.xlu0 %897
        %v900 = vadd.f32 %v879, %v888
        %v901 = vadd.f32 %v880, %v893
        %v902 = vadd.f32 %v881, %v898
        %v903 = vmul.f32 %v900, 0.5
        %v904 = vmul.f32 %v901, 0.5
        %v905 = vmul.f32 %v902, 0.5
        %v906 = vmul.f32 %v900, 0.70710677
        %v907 = vmul.f32 %v901, 0.70710677
        %v908 = vmul.f32 %v902, 0.70710677
        %v909 = verf.f32.pop %v906
        %v910 = verf.f32.pop %v907
        %v911 = verf.f32.pop %v908
        %v912 = vadd.f32 %v909, 1.0
        %v913 = vadd.f32 %v910, 1.0
        %v914 = vadd.f32 %v911, 1.0
        %v915 = vmul.f32 %v903, %v912
        %v916 = vmul.f32 %v904, %v913
        %v917 = vmul.f32 %v905, %v914
        %v918 = vld [vmem:[%s6] sm:$0xff]
        %v919 = vld [vmem:[%s6 + $0x8] sm:$0xff]
        %v920 = vld [vmem:[%s7] sm:$0xff]
        %v921 = vld [vmem:[%s7 + $0x8] sm:$0xff]
        %923 = vset.pattern.permute.xlu0 0
        %924 = vperm.xlu0 %923, %v920
        %v925 = vpop.permute.xlu0 %924
        %928 = vset.pattern.permute.xlu0 0
        %929 = vperm.xlu0 %928, %v921
        %v930 = vpop.permute.xlu0 %929
        %v933 = vsel %vm690, %v918, 0
        %v936 = vsel %vm690, %v919, 0
        %v939 = vsel %vm693, %v917, 0
        %941 = vmatprep.subr.mxu0 0.0
        %942 = vmatpush1.msra.mxu0 0.0
        %943 = vmatprep.subr.mxu0 0.0
        %944 = vmatpush1.msra.mxu0 0.0
        %945 = vmatprep.subr.mxu0 0.0
        %946 = vmatpush1.msra.mxu0 0.0
        %947 = vmatprep.subr.mxu0 0.0
        %948 = vmatpush1.msra.mxu0 0.0
        %949 = vmatprep.subr.mxu0 0.0
        %950 = vmatpush1.msra.mxu0 0.0
        %951 = vmatprep.subr.mxu0 0.0
        %952 = vmatpush1.msra.mxu0 0.0
        %953 = vmatprep.subr.mxu0 0.0
        %954 = vmatpush1.msra.mxu0 0.0
        %955 = vmatprep.subr.mxu0 0.0
        %956 = vmatpush1.msra.mxu0 0.0
        %957 = vmatprep.subr.mxu0 0.0
        %958 = vmatpush1.msra.mxu0 0.0
        %959 = vmatprep.subr.mxu0 0.0
        %960 = vmatpush1.msra.mxu0 0.0
        %961 = vmatprep.subr.mxu0 0.0
        %962 = vmatpush1.msra.mxu0 0.0
        %963 = vmatprep.subr.mxu0 0.0
        %964 = vmatpush1.msra.mxu0 0.0
        %965 = vmatprep.subr.mxu0 0.0
        %966 = vmatpush1.msra.mxu0 0.0
        %967 = vmatprep.subr.mxu0 0.0
        %968 = vmatpush1.msra.mxu0 %v939
        %969 = vmatprep.subr.mxu0 0.0
        %970 = vmatpush1.msra.mxu0 %v916
        %971 = vmatprep.subr.mxu0 0.0
        %972 = vmatpush1.msra.mxu0 %v915
        %973 = vmatprep.subr.mxu0 0.0
        %974 = vmatpush2.msra.mxu0 0.0
        %975 = vmatprep.subr.mxu0 0.0
        %976 = vmatpush2.msra.mxu0 0.0
        %977 = vmatprep.subr.mxu0 0.0
        %978 = vmatpush2.msra.mxu0 0.0
        %979 = vmatprep.subr.mxu0 0.0
        %980 = vmatpush2.msra.mxu0 0.0
        %981 = vmatprep.subr.mxu0 0.0
        %982 = vmatpush2.msra.mxu0 0.0
        %983 = vmatprep.subr.mxu0 0.0
        %984 = vmatpush2.msra.mxu0 0.0
        %985 = vmatprep.subr.mxu0 0.0
        %986 = vmatpush2.msra.mxu0 0.0
        %987 = vmatprep.subr.mxu0 0.0
        %988 = vmatpush2.msra.mxu0 0.0
        %989 = vmatprep.subr.mxu0 0.0
        %990 = vmatpush2.msra.mxu0 0.0
        %991 = vmatprep.subr.mxu0 0.0
        %992 = vmatpush2.msra.mxu0 0.0
        %993 = vmatprep.subr.mxu0 0.0
        %994 = vmatpush2.msra.mxu0 0.0
        %995 = vmatprep.subr.mxu0 0.0
        %996 = vmatpush2.msra.mxu0 0.0
        %997 = vmatprep.subr.mxu0 0.0
        %998 = vmatpush2.msra.mxu0 0.0
        %999 = vmatprep.subr.mxu0 0.0
        %1000 = vmatpush2.msra.mxu0 0.0
        %1001 = vmatprep.subr.mxu0 0.0
        %1002 = vmatpush2.msra.mxu0 0.0
        %1003 = vmatprep.subr.mxu0 0.0
        %1004 = vmatpush2.msra.mxu0 0.0
        %1005 = vmatprep.mubr.f32.mxu0 0.0
        %1006 = vmatmul.mubr.f32.gmra.mxu0 %v933
        %v1007 = vpop.f32.mrf.mxu0
        %v1008 = vadd.f32 %v925, %v1007
        %v1009 = vpop.f32.mrf.mxu0
        %1010 = vmatprep.mubr.f32.mxu0 0.0
        %1011 = vmatmul.mubr.f32.gmra.mxu0 %v936
        %v1012 = vpop.f32.mrf.mxu0
        %v1013 = vadd.f32 %v930, %v1012
        %v1014 = vpop.f32.mrf.mxu0
        %1015 = vdwg.mxu0
        %v1016 = vrsqrt.pop %v360
        %v1017 = vmul.f32 %v360, %v1016
        %vm1018 = vcmp.eq.f32.partialorder %v360, inf
        %v1019 = vsel %vm1018, %v360, %v1017
        %vm1020 = vcmp.eq.f32.partialorder %v360, 0.0
        %v1021 = vand.u32 %v360, 2147483648
        %v1022 = vsel %vm1020, %v1021, %v1019
        %v1023 = vadd.f32 %v1022, 1e-07
        %v1024 = vmul.f32 %v1023, 1e-07
        %v1025 = vadd.f32 %v1024, 2.0
        %v1026 = vrcp.pop %v1025
        %v1027 = vlaneseq
        %v1028 = vshrl.u32 %v1027, 7
        %v1029 = vsub.s32 0, %v1028
        %v1030 = vrot.slane %v1026, %v1029
        %v1031 = vmul.f32 %v1030, %v1008
        %v1032 = vmul.f32 %v1030, %v1013
        %1033 = vst [vmem:[%s354] sm:$0xff] %v1031
        %1034 = vst [vmem:[%s354 + $0x8] sm:$0xff] %v1032
        %s1035 = sand.u32 %s203, 1
        %s1036 = scalar_lea.sflag [#allocation4], %s1035
        %s1037 = sand.u32 %s203, 1
        %s1038 = smul.addr %s1037, 16
        %s1039 = scalar_lea.vmem [#allocation3], %s1038
        // Predicated region
        $region91: #{tpu_custom_call.1} parent=85 // pred_check
          %p1040 = pneg %p213
        $region92: #{tpu_custom_call.1} parent=85 // pred_check_branch
          %1042 = sbr.rel (%p1040) target = $region94
        $region93: #{tpu_custom_call.1} parent=85 // pred_region
          %s1044 = ssub.s32 256, 256
          %1045 = vsyncadd %s1036, %s1044
          %s1046 = smul.addr %s22, 128
          %s1047 = scalar_lea.hbm %s8, %s1046
          %s1048 = sshll.u32 %s1039, 4
          %s1049 = int_to_ptr.vmem [resolvable:$true] %s1048
          %1054 = dma.vmem_to_hbm [thread:$0]  %s1049, 256, %s1047, %s1036, 128, 256, 8
        $region94: #{tpu_custom_call.1} parent=85 // pred_fallthru
          _
      $region86: #{tpu_custom_call.1} parent=5 // pred_fallthru
        _
      %p1055 = scmp.le.s32.totalorder 2, %s17
      // Predicated region
      $region95: #{tpu_custom_call.1} parent=5 // pred_check
        %p1056 = pneg %p1055
      $region96: #{tpu_custom_call.1} parent=5 // pred_check_branch
        %1058 = sbr.rel (%p1056) target = $region98
      $region97: #{tpu_custom_call.1} parent=5 // pred_region
        %s1059 = ssub.s32 %s17, 2
        // Predicated region
        $region99: #{tpu_custom_call.1} parent=97 // pred_check
          %p1060 = pneg %p219
        $region100: #{tpu_custom_call.1} parent=97 // pred_check_branch
          %1062 = sbr.rel (%p1060) target = $region102
        $region101: #{tpu_custom_call.1} parent=97 // pred_region
          %s1063 = sand.u32 %s204, 1
          %s1064 = scalar_lea.sflag [#allocation4], %s1063
          %s1065 = sand.u32 %s204, 1
          %s1066 = smul.addr %s1065, 16
          %s1067 = scalar_lea.vmem [#allocation3], %s1066
          %1068 = dma.done %s1064, 256
        $region102: #{tpu_custom_call.1} parent=97 // pred_fallthru
          _
      $region98: #{tpu_custom_call.1} parent=5 // pred_fallthru
        _
    $region6: #{tpu_custom_call.1} parent=1 // loop_footer
      %s21 = sadd.s32 1, %s17
    $region7: #{tpu_custom_call.1} parent=1 // loop_footer_branch
      %16 = sbr.rel target = $region3
    $region8: #{tpu_custom_call.1} parent=1 // loop_exit
      _
    %1069 = vsyncpa [#allocation4], 1
    %s1070 = scalar_lea.sflag [#allocation4], 1
    %1071 = vsyncpa %s1070, 1

</llo_original>
